<compile_context>
chip_gen: v5e
topology: v5e:2x2
jax: 0.10.0
libtpu: 0.0.40
codegen_flags: <defaults>
</compile_context>

<pallas_src>
import jax
import jax.numpy as jnp
from jax import lax
from jax.experimental import pallas as pl
from jax.experimental.pallas import tpu as pltpu

_LANE = 128
# Explicit scoped-VMEM cap: <= 48 MiB so the same build fits v7x's 64 MiB
# physical VMEM while being a no-op headroom-wise on v5e/v6e (128 MiB).
_VMEM_LIMIT = 48 * 1024 * 1024


def _round_up(v, m):
    return (v + m - 1) // m * m


def _choose_tile(n, target=256):
    """Largest divisor of n that is <= target and a multiple of 8 (else n)."""
    if n <= target:
        return n
    for t in range(target, 7, -1):
        if n % t == 0 and t % 8 == 0:
            return t
    return n


# ----------------------------- stage 1 kernel --------------------------------
def _proj_kernel(x_ref, wcat_ref, bcat_ref, g_ref, theta_ref, phi_ref):
    # x_ref:    (1, T, Cp)      f32 token tile
    # wcat_ref: (Cp, 3*Cip)     bf16 fused [Wg | Wtheta | Wphi]
    # bcat_ref: (1, 3*Cip)      f32 fused bias (added once per tile)
    # outputs:  (1, T, Cip)     bf16 g / theta / phi
    cip = g_ref.shape[-1]
    x = x_ref[0].astype(jnp.bfloat16)
    proj = jnp.dot(x, wcat_ref[...], preferred_element_type=jnp.float32)
    proj = (proj + bcat_ref[...]).astype(jnp.bfloat16)
    g_ref[0] = proj[:, :cip]
    theta_ref[0] = proj[:, cip:2 * cip]
    phi_ref[0] = proj[:, 2 * cip:]


# ----------------------------- stage 2 kernel --------------------------------
def _attn_kernel(xq_ref, thetaq_ref, phi_ref, g_ref, ww_ref, bw_ref, o_ref):
    # xq_ref:     (1, TQ, Cp)  f32  query-tile of x (for the residual)
    # thetaq_ref: (1, TQ, Cip) bf16 query-tile of theta
    # phi_ref:    (1, N, Cip)  bf16 all keys
    # g_ref:      (1, N, Cip)  bf16 all values
    # ww_ref:     (Cip, Cp)    bf16 output 1x1-conv weight
    # bw_ref:     (1, Cp)      f32  output 1x1-conv bias
    theta = thetaq_ref[0]
    phi = phi_ref[0]
    # f[i, j] = <theta_i, phi_j>  -> (TQ, N); bf16 operands, f32 MXU accumulation
    f = lax.dot_general(theta, phi, (((1,), (1,)), ((), ())),
                        preferred_element_type=jnp.float32)
    # numerically stable softmax over keys (f32 on VPU/EUP)
    f = f - jnp.max(f, axis=-1, keepdims=True)
    p = jnp.exp(f)
    inv = pl.reciprocal(jnp.sum(p, axis=-1, keepdims=True), approx=True)
    p = (p * inv).astype(jnp.bfloat16)
    # y_i = sum_j p[i, j] * g_j  -> (TQ, Cip)
    y = jnp.dot(p, g_ref[0], preferred_element_type=jnp.float32)
    # output 1x1 conv back to Cp channels + residual
    w_y = jnp.dot(y.astype(jnp.bfloat16), ww_ref[...],
                  preferred_element_type=jnp.float32) + bw_ref[...]
    o_ref[0] = (xq_ref[0] + w_y).astype(o_ref.dtype)


# ------------------------------- wrapper --------------------------------------
def nonlocal_block(x_nchw, params, *, tile_tokens=256):
    """x_nchw: (B, C, H, W) float32.  Returns (B, C, H, W)."""
    B, C, H, W = x_nchw.shape
    Ci = C // 2
    N = H * W
    Cp = _round_up(C, _LANE)
    Cip = _round_up(Ci, _LANE)
    TQ = _choose_tile(N, tile_tokens)
    n_tiles = N // TQ

    # NCHW -> (B, N, C) tokens, lane-padded to Cp (pad fused with the transpose).
    x_tok = jnp.transpose(x_nchw, (0, 2, 3, 1)).reshape(B, N, C)
    x_pad = jnp.pad(x_tok, ((0, 0), (0, 0), (0, Cp - C))).astype(jnp.float32)

    def pad_wt(w, cin, cout, cin_p, cout_p):
        # (cout, cin, 1, 1) conv weight -> (cin, cout) so `token @ W` works,
        # zero-padded to lane-multiples (padding channels contribute exact zeros)
        wt = w.reshape(cout, cin).T
        return jnp.pad(wt, ((0, cin_p - cin), (0, cout_p - cout)))

    def pad_b(b, cout, cout_p):
        return jnp.pad(b.reshape(-1), (0, cout_p - cout))

    # Fused projection weight [Wg | Wtheta | Wphi] : (Cp, 3*Cip) bf16
    wcat = jnp.concatenate(
        [pad_wt(params["g_w"], C, Ci, Cp, Cip),
         pad_wt(params["theta_w"], C, Ci, Cp, Cip),
         pad_wt(params["phi_w"], C, Ci, Cp, Cip)], axis=1).astype(jnp.bfloat16)
    bcat = jnp.concatenate(
        [pad_b(params["g_b"], Ci, Cip),
         pad_b(params["theta_b"], Ci, Cip),
         pad_b(params["phi_b"], Ci, Cip)]).reshape(1, 3 * Cip).astype(jnp.float32)
    ww = pad_wt(params["W_w"], Ci, C, Cip, Cp).astype(jnp.bfloat16)
    bw = pad_b(params["W_b"], C, Cp).reshape(1, Cp).astype(jnp.float32)

    cparams = pltpu.CompilerParams(
        dimension_semantics=("parallel", "parallel"),
        vmem_limit_bytes=_VMEM_LIMIT)

    # --- stage 1: fused 1x1-conv projections -> g / theta / phi (bf16) -------
    g_x, theta_x, phi_x = pl.pallas_call(
        _proj_kernel,
        out_shape=tuple(jax.ShapeDtypeStruct((B, N, Cip), jnp.bfloat16)
                        for _ in range(3)),
        grid_spec=pltpu.PrefetchScalarGridSpec(
            num_scalar_prefetch=0,
            grid=(B, n_tiles),
            in_specs=[
                pl.BlockSpec((1, TQ, Cp), lambda b, i: (b, i, 0)),      # x tile
                pl.BlockSpec((Cp, 3 * Cip), lambda b, i: (0, 0)),       # wcat
                pl.BlockSpec((1, 3 * Cip), lambda b, i: (0, 0)),        # bcat
            ],
            out_specs=tuple(pl.BlockSpec((1, TQ, Cip), lambda b, i: (b, i, 0))
                            for _ in range(3)),
        ),
        compiler_params=cparams,
    )(x_pad, wcat, bcat)

    # --- stage 2: attention tiled over query rows + W-proj + residual --------
    out_pad = pl.pallas_call(
        _attn_kernel,
        out_shape=jax.ShapeDtypeStruct((B, N, Cp), jnp.float32),
        grid_spec=pltpu.PrefetchScalarGridSpec(
            num_scalar_prefetch=0,
            grid=(B, n_tiles),
            in_specs=[
                pl.BlockSpec((1, TQ, Cp), lambda b, i: (b, i, 0)),      # x (residual)
                pl.BlockSpec((1, TQ, Cip), lambda b, i: (b, i, 0)),     # theta tile
                pl.BlockSpec((1, N, Cip), lambda b, i: (b, 0, 0)),      # phi (keys)
                pl.BlockSpec((1, N, Cip), lambda b, i: (b, 0, 0)),      # g (values)
                pl.BlockSpec((Cip, Cp), lambda b, i: (0, 0)),           # W weight
                pl.BlockSpec((1, Cp), lambda b, i: (0, 0)),             # W bias
            ],
            out_specs=pl.BlockSpec((1, TQ, Cp), lambda b, i: (b, i, 0)),
        ),
        compiler_params=cparams,
    )(x_pad, theta_x, phi_x, g_x, ww, bw)

    # strip channel padding, back to NCHW
    out = out_pad[:, :, :C].reshape(B, H, W, C)
    return jnp.transpose(out, (0, 3, 1, 2)).astype(x_nchw.dtype)


# ------------------------------ reference --------------------------------------
def nonlocal_block_ref(x, params):
    """Pure-JAX f32 reference mirroring the PyTorch forward (NCHW)."""
    B, C, H, W = x.shape
    Ci = C // 2
    conv1x1 = lambda inp, w, b: (
        jnp.einsum("bchw,oc->bohw", inp, w.reshape(-1, inp.shape[1]))
        + b.reshape(1, -1, 1, 1))
    g_x = conv1x1(x, params["g_w"], params["g_b"]).reshape(B, Ci, -1)
    theta_x = conv1x1(x, params["theta_w"], params["theta_b"]).reshape(B, Ci, -1)
    phi_x = conv1x1(x, params["phi_w"], params["phi_b"]).reshape(B, Ci, -1)
    theta_x = jnp.transpose(theta_x, (0, 2, 1))
    f = jnp.matmul(theta_x, phi_x)
    f_div_c = jax.nn.softmax(f, axis=-1)
    y = jnp.matmul(f_div_c, jnp.transpose(g_x, (0, 2, 1)))
    y = jnp.transpose(y, (0, 2, 1)).reshape(B, Ci, H, W)
    y = conv1x1(y, params["W_w"], params["W_b"])
    return x + y


def init_params(key, in_channels):
    Ci = in_channels // 2
    ks = jax.random.split(key, 6)
    scale = 1.0 / jnp.sqrt(in_channels)
    params = {
        "g_w": jax.random.uniform(ks[0], (Ci, in_channels, 1, 1),
                                  minval=-scale, maxval=scale, dtype=jnp.float32),
        "g_b": jax.random.uniform(ks[1], (Ci,), minval=-scale, maxval=scale,
                                  dtype=jnp.float32),
        "theta_w": jax.random.uniform(ks[2], (Ci, in_channels, 1, 1),
                                      minval=-scale, maxval=scale, dtype=jnp.float32),
        "theta_b": jax.random.uniform(ks[3], (Ci,), minval=-scale, maxval=scale,
                                      dtype=jnp.float32),
        "phi_w": jax.random.uniform(ks[4], (Ci, in_channels, 1, 1),
                                    minval=-scale, maxval=scale, dtype=jnp.float32),
        "phi_b": jax.random.uniform(ks[5], (Ci,), minval=-scale, maxval=scale,
                                    dtype=jnp.float32),
        # nn.init.constant_(W.weight, 0), constant_(W.bias, 0)
        "W_w": jnp.zeros((in_channels, Ci, 1, 1), dtype=jnp.float32),
        "W_b": jnp.zeros((in_channels,), dtype=jnp.float32),
    }
    return params


if __name__ == "__main__":
    key = jax.random.PRNGKey(0)
    kx, kp, kw, kb = jax.random.split(key, 4)

    B, C, H, W = 2, 4, 16, 16
    x = jax.random.normal(kx, (B, C, H, W), dtype=jnp.float32)

    # Case 1: exact PyTorch init (W zero-initialized) -> output == input.
    params = init_params(kp, C)
    out0 = jax.block_until_ready(nonlocal_block(x, params))
    ref0 = nonlocal_block_ref(x, params)
    assert out0.shape == (B, C, H, W)
    assert jnp.allclose(out0, ref0, atol=1e-5, rtol=1e-5), "zero-W mismatch vs reference"
    assert jnp.allclose(out0, x, atol=1e-5, rtol=1e-5), "zero-W residual not identity"

    # Case 2: non-zero output-conv weights to exercise the full attention +
    # W-projection path (bf16 MXU operands, f32 accumulation -> loosened tol).
    Ci = C // 2
    wscale = 1.0 / jnp.sqrt(Ci)
    params2 = dict(params)
    params2["W_w"] = jax.random.uniform(kw, (C, Ci, 1, 1), minval=-wscale,
                                        maxval=wscale, dtype=jnp.float32)
    params2["W_b"] = jax.random.uniform(kb, (C,), minval=-wscale, maxval=wscale,
                                        dtype=jnp.float32)
    out1 = jax.block_until_ready(nonlocal_block(x, params2))
    ref1 = nonlocal_block_ref(x, params2)
    max_err = float(jnp.max(jnp.abs(out1 - ref1)))
    assert jnp.allclose(out1, ref1, atol=5e-2, rtol=5e-2), f"max abs err {max_err}"

    print("KERNEL_OK")
</pallas_src>

<mosaic_0001>
module attributes {stable_mosaic.version = 11 : i64} {
  func.func @_proj_kernel(%arg0: i32, %arg1: i32, %arg2: memref<1x256x128xf32, #tpu.memory_space<vmem>>, %arg3: memref<128x384xbf16, #tpu.memory_space<vmem>>, %arg4: memref<1x384xf32, #tpu.memory_space<vmem>>, %arg5: memref<1x256x128xbf16, #tpu.memory_space<vmem>>, %arg6: memref<1x256x128xbf16, #tpu.memory_space<vmem>>, %arg7: memref<1x256x128xbf16, #tpu.memory_space<vmem>>) attributes {dimension_semantics = [#tpu.dimension_semantics<parallel>, #tpu.dimension_semantics<parallel>], iteration_bounds = array<i64: 2, 1>, scalar_prefetch = 0 : i64, scratch_operands = 0 : i64, tpu.core_type = #tpu.core_type<tc>, window_params = [{transform_indices = @transform_0, window_bounds = array<i64: 1, 256, 128>}, {pipeline_mode = #tpu.pipeline_mode<synchronous>, transform_indices = @transform_1, window_bounds = array<i64: 128, 384>}, {pipeline_mode = #tpu.pipeline_mode<synchronous>, transform_indices = @transform_2, window_bounds = array<i64: 1, 384>}, {transform_indices = @transform_3, window_bounds = array<i64: 1, 256, 128>}, {transform_indices = @transform_4, window_bounds = array<i64: 1, 256, 128>}, {transform_indices = @transform_5, window_bounds = array<i64: 1, 256, 128>}]} {
    %c0 = arith.constant 0 : index
    %c0_0 = arith.constant 0 : index
    %c0_1 = arith.constant 0 : index
    %0 = vector.load %arg2[%c0, %c0_0, %c0_1] : memref<1x256x128xf32, #tpu.memory_space<vmem>>, vector<1x256x128xf32>
    %1 = vector.shape_cast %0 : vector<1x256x128xf32> to vector<256x128xf32>
    %2 = arith.truncf %1 : vector<256x128xf32> to vector<256x128xbf16>
    %c0_2 = arith.constant 0 : index
    %c0_3 = arith.constant 0 : index
    %3 = vector.load %arg3[%c0_2, %c0_3] : memref<128x384xbf16, #tpu.memory_space<vmem>>, vector<128x384xbf16>
    %cst = arith.constant dense<0.000000e+00> : vector<256x384xf32>
    %4 = tpu.matmul %2, %3, %cst {dimension_numbers = #tpu.dot_dimension_numbers<[1], [0], [0], [1], [0, 0, 1, 1], [], []>} : vector<256x128xbf16>, vector<128x384xbf16>, vector<256x384xf32> -> vector<256x384xf32>
    %c0_4 = arith.constant 0 : index
    %c0_5 = arith.constant 0 : index
    %5 = vector.load %arg4[%c0_4, %c0_5] : memref<1x384xf32, #tpu.memory_space<vmem>>, vector<1x384xf32>
    %6 = vector.broadcast %5 : vector<1x384xf32> to vector<256x384xf32>
    %7 = arith.addf %4, %6 : vector<256x384xf32>
    %8 = arith.truncf %7 : vector<256x384xf32> to vector<256x384xbf16>
    %9 = vector.extract_strided_slice %8 {offsets = [0, 0], sizes = [256, 128], strides = [1, 1]} : vector<256x384xbf16> to vector<256x128xbf16>
    %c0_6 = arith.constant 0 : index
    %c0_7 = arith.constant 0 : index
    %c0_8 = arith.constant 0 : index
    %10 = vector.load %arg5[%c0_6, %c0_7, %c0_8] : memref<1x256x128xbf16, #tpu.memory_space<vmem>>, vector<1x256x128xbf16>
    %11 = vector.shape_cast %10 : vector<1x256x128xbf16> to vector<256x128xbf16>
    %12 = vector.shape_cast %9 : vector<256x128xbf16> to vector<1x256x128xbf16>
    tpu.vector_store %arg5[%c0_6, %c0_7, %c0_8], %12 {strides = array<i32>} : memref<1x256x128xbf16, #tpu.memory_space<vmem>>, vector<1x256x128xbf16>,
    %13 = vector.extract_strided_slice %8 {offsets = [0, 128], sizes = [256, 128], strides = [1, 1]} : vector<256x384xbf16> to vector<256x128xbf16>
    %c0_9 = arith.constant 0 : index
    %c0_10 = arith.constant 0 : index
    %c0_11 = arith.constant 0 : index
    %14 = vector.load %arg6[%c0_9, %c0_10, %c0_11] : memref<1x256x128xbf16, #tpu.memory_space<vmem>>, vector<1x256x128xbf16>
    %15 = vector.shape_cast %14 : vector<1x256x128xbf16> to vector<256x128xbf16>
    %16 = vector.shape_cast %13 : vector<256x128xbf16> to vector<1x256x128xbf16>
    tpu.vector_store %arg6[%c0_9, %c0_10, %c0_11], %16 {strides = array<i32>} : memref<1x256x128xbf16, #tpu.memory_space<vmem>>, vector<1x256x128xbf16>,
    %17 = vector.extract_strided_slice %8 {offsets = [0, 256], sizes = [256, 128], strides = [1, 1]} : vector<256x384xbf16> to vector<256x128xbf16>
    %c0_12 = arith.constant 0 : index
    %c0_13 = arith.constant 0 : index
    %c0_14 = arith.constant 0 : index
    %18 = vector.load %arg7[%c0_12, %c0_13, %c0_14] : memref<1x256x128xbf16, #tpu.memory_space<vmem>>, vector<1x256x128xbf16>
    %19 = vector.shape_cast %18 : vector<1x256x128xbf16> to vector<256x128xbf16>
    %20 = vector.shape_cast %17 : vector<256x128xbf16> to vector<1x256x128xbf16>
    tpu.vector_store %arg7[%c0_12, %c0_13, %c0_14], %20 {strides = array<i32>} : memref<1x256x128xbf16, #tpu.memory_space<vmem>>, vector<1x256x128xbf16>,
    return
  }
  func.func @transform_0(%arg0: i32, %arg1: i32) -> (i32, i32, i32) {
    %c0_i32 = arith.constant 0 : i32
    %c0_i32_0 = arith.constant 0 : i32
    return %arg0, %arg1, %c0_i32 : i32, i32, i32
  }
  func.func @transform_1(%arg0: i32, %arg1: i32) -> (i32, i32) {
    %c0_i32 = arith.constant 0 : i32
    %c0_i32_0 = arith.constant 0 : i32
    %c0_i32_1 = arith.constant 0 : i32
    return %c0_i32, %c0_i32_0 : i32, i32
  }
  func.func @transform_2(%arg0: i32, %arg1: i32) -> (i32, i32) {
    %c0_i32 = arith.constant 0 : i32
    %c0_i32_0 = arith.constant 0 : i32
    %c0_i32_1 = arith.constant 0 : i32
    return %c0_i32, %c0_i32_0 : i32, i32
  }
  func.func @transform_3(%arg0: i32, %arg1: i32) -> (i32, i32, i32) {
    %c0_i32 = arith.constant 0 : i32
    %c0_i32_0 = arith.constant 0 : i32
    return %arg0, %arg1, %c0_i32 : i32, i32, i32
  }
  func.func @transform_4(%arg0: i32, %arg1: i32) -> (i32, i32, i32) {
    %c0_i32 = arith.constant 0 : i32
    %c0_i32_0 = arith.constant 0 : i32
    return %arg0, %arg1, %c0_i32 : i32, i32, i32
  }
  func.func @transform_5(%arg0: i32, %arg1: i32) -> (i32, i32, i32) {
    %c0_i32 = arith.constant 0 : i32
    %c0_i32_0 = arith.constant 0 : i32
    return %arg0, %arg1, %c0_i32 : i32, i32, i32
  }
}

</mosaic_0001>

<llo_original>
// kernel: tpu_custom_call.1
$region0: #{tpu_custom_call.1}
  #allocation0 [shape = 'u32[]', space=smem, size = 0x4, offset = 0x4, fixed_abs, tag = 'smem constant byte address 0x4 - core index']
  #allocation1 [shape = 'u32[72,128]{1,0:T(1,128)}', space=vmem, size = 0x9000, scoped, tag = 'internal scratch']
  %s0 = inlined_call_operand.hbm [shape: f32[2,256,128], index: 0, kind: input, shape index: {}]
  %s1 = inlined_call_operand.hbm [shape: bf16[128,384], index: 1, kind: input, shape index: {}]
  %s2 = inlined_call_operand.hbm [shape: f32[1,384], index: 2, kind: input, shape index: {}]
  %s3 = inlined_call_operand.hbm [shape: bf16[2,256,128], index: 3, kind: output, shape index: {0}]
  %s4 = inlined_call_operand.hbm [shape: bf16[2,256,128], index: 4, kind: output, shape index: {1}]
  %s5 = inlined_call_operand.hbm [shape: bf16[2,256,128], index: 5, kind: output, shape index: {2}]
  %6 = xla_tuple %s3, %s4, %s5
  %s7 = sld [smem:[#allocation0]]
  $region73: #{tpu_custom_call.1} parent=0
    _
  %s9 = ssub.s32 1, %s7
  %s10 = scalar_select 0, %s9, %s7
  $region1: #{tpu_custom_call.1} parent=0
    #allocation2 [shape = 'u8[262144]{0}', space=vmem, size = 0x40000, scoped, tag = 'input window, operand 0']
    #allocation3 [shape = 's32[2]{0}', space=sflag, size = 0x8, scoped, tag = 'scoped memory for tpu_custom_call.1']
    #allocation4 [shape = 's32[2]{0}', space=sflag, size = 0x8, scoped, tag = 'scoped memory for tpu_custom_call.1']
    #allocation5 [shape = 'u8[98304]{0}', space=vmem, size = 0x18000, scoped, tag = 'input window, operand 1, single buffered']
    #allocation6 [shape = 's32[1]{0}', space=sflag, size = 0x4, scoped, tag = 'scoped memory for tpu_custom_call.1']
    #allocation7 [shape = 'u8[1536]{0}', space=vmem, size = 0x800, scoped, tag = 'input window, operand 2, single buffered']
    #allocation8 [shape = 'u8[131072]{0}', space=vmem, size = 0x20000, scoped, tag = 'output window, operand 0']
    #allocation9 [shape = 'u8[131072]{0}', space=vmem, size = 0x20000, scoped, tag = 'output window, operand 1']
    #allocation10 [shape = 's32[2]{0}', space=sflag, size = 0x8, scoped, tag = 'scoped memory for tpu_custom_call.1']
    #allocation11 [shape = 'u8[131072]{0}', space=vmem, size = 0x20000, scoped, tag = 'output window, operand 2']
    %11 = vsyncpa [#allocation3], 0
    %s12 = scalar_lea.sflag [#allocation3], 1
    %13 = vsyncpa %s12, 0
    %14 = vsyncpa [#allocation6], 0
    %15 = vsyncpa [#allocation4], 0
    %s16 = scalar_lea.sflag [#allocation4], 1
    %17 = vsyncpa %s16, 0
    %18 = vsyncpa [#allocation10], 0
    %s19 = scalar_lea.sflag [#allocation10], 1
    %20 = vsyncpa %s19, 0
    loop: start=0, step=1, limit=4
    $region2: #{tpu_custom_call.1} parent=1 // loop_pre_header
      _
    $region3: #{tpu_custom_call.1} parent=1 // loop_header
      %s22 = sphi 0, %s26
      %p23 = scmp.ge.s32.totalorder %s22, 4
      %s29 = sphi 0, %s41
      %s30 = sphi 0, %s37
      %s31 = sphi 0, %s29
      %s32 = sphi 0, %s30
      %s33 = sphi 0, %s31
      %s34 = sphi 0, %s32
      %s46 = sphi 0, %s48
      %s49 = sphi 0, %s46
      %s50 = sphi 0, %s49
      %s66 = sphi 0, %s50
      %s70 = sphi 0, %s70
      %s72 = sphi 0, %s70
      %s73 = sphi 0, %s72
      %s87 = sphi 0, %s73
      %s91 = sphi 0, %s91
      %s93 = sphi 0, %s91
      %s94 = sphi 0, %s93
      %s108 = sphi 0, %s94
      %s116 = sphi 0, %s118
      %s119 = sphi 0, %s116
      %s120 = sphi 0, %s119
      %s136 = sphi 0, %s120
      %s144 = sphi 0, %s146
      %s147 = sphi 0, %s144
      %s148 = sphi 0, %s147
      %s164 = sphi 0, %s148
      %s172 = sphi 0, %s174
      %s175 = sphi 0, %s172
      %s176 = sphi 0, %s175
      %s192 = sphi 0, %s176
    $region4: #{tpu_custom_call.1} parent=1 // loop_header_branch
      %25 = sbr.rel (%p23) target = $region8
    $region5: #{tpu_custom_call.1} parent=1 // loop_body
      %s27 = ssub.s32 %s22, 1
      %s28 = ssub.s32 %s22, 2
      %s35 = sadd.s32 1, %s30
      %p36 = scmp.ge.s32.totalorder %s35, 1
      %s37 = scalar_select %p36, 0, %s35
      %s38 = sadd.s32 1, %s29
      %s39 = scalar_select %p36, %s38, %s29
      %p40 = scmp.ge.s32.totalorder %s39, 2
      %s41 = scalar_select %p40, 0, %s39
      %s42 = ssub.s32 %s29, %s41
      %s43 = ssub.s32 %s30, %s37
      %s44 = sor.u32 %s42, %s43
      %p45 = scmp.eq.s32.totalorder %s44, 0
      %s47 = sadd.s32 %s46, 1
      %s48 = scalar_select %p45, %s46, %s47
      %p51 = pneg %p45
      %p52 = scmp.eq.s32.totalorder %s22, 1
      %p53 = por %p51, %p52
      %p54 = scmp.ne.s32.totalorder %s46, %s49
      %p55 = scmp.eq.s32.totalorder %s22, 0
      %p56 = por %p54, %p55
      %p57 = scmp.ne.s32.totalorder %s46, %s49
      %p58 = scmp.eq.s32.totalorder %s27, 1
      %p59 = por %p57, %p58
      %p60 = scmp.ne.s32.totalorder %s49, %s50
      %p61 = scmp.eq.s32.totalorder %s27, 0
      %p62 = por %p60, %p61
      %p63 = scmp.ne.s32.totalorder %s49, %s50
      %p64 = scmp.eq.s32.totalorder %s28, 1
      %p65 = por %p63, %p64
      %p67 = scmp.ne.s32.totalorder %s50, %s66
      %p68 = scmp.eq.s32.totalorder %s28, 0
      %p69 = por %p67, %p68
      %s71 = sadd.s32 %s70, 1
      %p74 = scmp.eq.s32.totalorder %s22, 1
      %p75 = scmp.ne.s32.totalorder %s70, %s72
      %p76 = scmp.eq.s32.totalorder %s22, 0
      %p77 = por %p75, %p76
      %p78 = scmp.ne.s32.totalorder %s70, %s72
      %p79 = scmp.eq.s32.totalorder %s27, 1
      %p80 = por %p78, %p79
      %p81 = scmp.ne.s32.totalorder %s72, %s73
      %p82 = scmp.eq.s32.totalorder %s27, 0
      %p83 = por %p81, %p82
      %p84 = scmp.ne.s32.totalorder %s72, %s73
      %p85 = scmp.eq.s32.totalorder %s28, 1
      %p86 = por %p84, %p85
      %p88 = scmp.ne.s32.totalorder %s73, %s87
      %p89 = scmp.eq.s32.totalorder %s28, 0
      %p90 = por %p88, %p89
      %s92 = sadd.s32 %s91, 1
      %p95 = scmp.eq.s32.totalorder %s22, 1
      %p96 = scmp.ne.s32.totalorder %s91, %s93
      %p97 = scmp.eq.s32.totalorder %s22, 0
      %p98 = por %p96, %p97
      %p99 = scmp.ne.s32.totalorder %s91, %s93
      %p100 = scmp.eq.s32.totalorder %s27, 1
      %p101 = por %p99, %p100
      %p102 = scmp.ne.s32.totalorder %s93, %s94
      %p103 = scmp.eq.s32.totalorder %s27, 0
      %p104 = por %p102, %p103
      %p105 = scmp.ne.s32.totalorder %s93, %s94
      %p106 = scmp.eq.s32.totalorder %s28, 1
      %p107 = por %p105, %p106
      %p109 = scmp.ne.s32.totalorder %s94, %s108
      %p110 = scmp.eq.s32.totalorder %s28, 0
      %p111 = por %p109, %p110
      %s112 = ssub.s32 %s29, %s41
      %s113 = ssub.s32 %s30, %s37
      %s114 = sor.u32 %s112, %s113
      %p115 = scmp.eq.s32.totalorder %s114, 0
      %s117 = sadd.s32 %s116, 1
      %s118 = scalar_select %p115, %s116, %s117
      %p121 = pneg %p115
      %p122 = scmp.eq.s32.totalorder %s22, 1
      %p123 = por %p121, %p122
      %p124 = scmp.ne.s32.totalorder %s116, %s119
      %p125 = scmp.eq.s32.totalorder %s22, 0
      %p126 = por %p124, %p125
      %p127 = scmp.ne.s32.totalorder %s116, %s119
      %p128 = scmp.eq.s32.totalorder %s27, 1
      %p129 = por %p127, %p128
      %p130 = scmp.ne.s32.totalorder %s119, %s120
      %p131 = scmp.eq.s32.totalorder %s27, 0
      %p132 = por %p130, %p131
      %p133 = scmp.ne.s32.totalorder %s119, %s120
      %p134 = scmp.eq.s32.totalorder %s28, 1
      %p135 = por %p133, %p134
      %p137 = scmp.ne.s32.totalorder %s120, %s136
      %p138 = scmp.eq.s32.totalorder %s28, 0
      %p139 = por %p137, %p138
      %s140 = ssub.s32 %s29, %s41
      %s141 = ssub.s32 %s30, %s37
      %s142 = sor.u32 %s140, %s141
      %p143 = scmp.eq.s32.totalorder %s142, 0
      %s145 = sadd.s32 %s144, 1
      %s146 = scalar_select %p143, %s144, %s145
      %p149 = pneg %p143
      %p150 = scmp.eq.s32.totalorder %s22, 1
      %p151 = por %p149, %p150
      %p152 = scmp.ne.s32.totalorder %s144, %s147
      %p153 = scmp.eq.s32.totalorder %s22, 0
      %p154 = por %p152, %p153
      %p155 = scmp.ne.s32.totalorder %s144, %s147
      %p156 = scmp.eq.s32.totalorder %s27, 1
      %p157 = por %p155, %p156
      %p158 = scmp.ne.s32.totalorder %s147, %s148
      %p159 = scmp.eq.s32.totalorder %s27, 0
      %p160 = por %p158, %p159
      %p161 = scmp.ne.s32.totalorder %s147, %s148
      %p162 = scmp.eq.s32.totalorder %s28, 1
      %p163 = por %p161, %p162
      %p165 = scmp.ne.s32.totalorder %s148, %s164
      %p166 = scmp.eq.s32.totalorder %s28, 0
      %p167 = por %p165, %p166
      %s168 = ssub.s32 %s29, %s41
      %s169 = ssub.s32 %s30, %s37
      %s170 = sor.u32 %s168, %s169
      %p171 = scmp.eq.s32.totalorder %s170, 0
      %s173 = sadd.s32 %s172, 1
      %s174 = scalar_select %p171, %s172, %s173
      %p177 = pneg %p171
      %p178 = scmp.eq.s32.totalorder %s22, 1
      %p179 = por %p177, %p178
      %p180 = scmp.ne.s32.totalorder %s172, %s175
      %p181 = scmp.eq.s32.totalorder %s22, 0
      %p182 = por %p180, %p181
      %p183 = scmp.ne.s32.totalorder %s172, %s175
      %p184 = scmp.eq.s32.totalorder %s27, 1
      %p185 = por %p183, %p184
      %p186 = scmp.ne.s32.totalorder %s175, %s176
      %p187 = scmp.eq.s32.totalorder %s27, 0
      %p188 = por %p186, %p187
      %p189 = scmp.ne.s32.totalorder %s175, %s176
      %p190 = scmp.eq.s32.totalorder %s28, 1
      %p191 = por %p189, %p190
      %p193 = scmp.ne.s32.totalorder %s176, %s192
      %p194 = scmp.eq.s32.totalorder %s28, 0
      %p195 = por %p193, %p194
      %p196 = scmp.le.s32.totalorder 1, %s22
      %p197 = scmp.lt.s32.totalorder %s22, 3
      %p198 = pnand %p196, %p197
      %p199 = pneg %p198
      // Predicated region
      $region9: #{tpu_custom_call.1} parent=5 // pred_check
        _
      $region10: #{tpu_custom_call.1} parent=5 // pred_check_branch
        %201 = sbr.rel (%p198) target = $region12
      $region11: #{tpu_custom_call.1} parent=5 // pred_region
        %s202 = ssub.s32 %s22, 1
        // Predicated region
        $region13: #{tpu_custom_call.1} parent=11 // pred_check
          %p203 = pneg %p83
        $region14: #{tpu_custom_call.1} parent=11 // pred_check_branch
          %205 = sbr.rel (%p203) target = $region16
        $region15: #{tpu_custom_call.1} parent=11 // pred_region
          %207 = vsyncadd [#allocation6], 0
          %s208 = sshll.u32 %s1, 4
          %s209 = int_to_ptr.hbm [resolvable:$true] %s208
          %s210 = sshll.u32 [#allocation5], 4
          %s211 = int_to_ptr.vmem [resolvable:$true] %s210
          %216 = dma.hbm_to_vmem [thread:$0]  %s209, 3072, %s211, [#allocation6], 192, 192, 12
        $region16: #{tpu_custom_call.1} parent=11 // pred_fallthru
          _
        // Predicated region
        $region17: #{tpu_custom_call.1} parent=11 // pred_check
          %p217 = pneg %p104
        $region18: #{tpu_custom_call.1} parent=11 // pred_check_branch
          %219 = sbr.rel (%p217) target = $region20
        $region19: #{tpu_custom_call.1} parent=11 // pred_region
          %221 = vsyncadd [#allocation6], 0
          %s223 = sshll.u32 %s2, 4
          %s224 = int_to_ptr.hbm [resolvable:$true] %s223
          %s225 = sshll.u32 [#allocation7], 4
          %s226 = int_to_ptr.vmem [resolvable:$true] %s225
          %228 = dma.hbm_to_vmem [thread:$0]  %s224, 48, %s226, [#allocation6]
        $region20: #{tpu_custom_call.1} parent=11 // pred_fallthru
          _
      $region12: #{tpu_custom_call.1} parent=5 // pred_fallthru
        _
      %p229 = scmp.lt.s32.totalorder %s22, 2
      // Predicated region
      $region21: #{tpu_custom_call.1} parent=5 // pred_check
        %p230 = pneg %p229
      $region22: #{tpu_custom_call.1} parent=5 // pred_check_branch
        %232 = sbr.rel (%p230) target = $region24
      $region23: #{tpu_custom_call.1} parent=5 // pred_region
        // Predicated region
        $region25: #{tpu_custom_call.1} parent=23 // pred_check
          %p233 = pneg %p56
        $region26: #{tpu_custom_call.1} parent=23 // pred_check_branch
          %235 = sbr.rel (%p233) target = $region28
        $region27: #{tpu_custom_call.1} parent=23 // pred_region
          %s236 = sand.u32 %s46, 1
          %s237 = scalar_lea.sflag [#allocation3], %s236
          %s238 = sand.u32 %s46, 1
          %s239 = smul.addr %s238, 256
          %s240 = scalar_lea.vmem [#allocation2], %s239
          %s241 = smul.u32 32, %s30
          %243 = vsyncadd %s237, 0
          %s244 = smul.addr %s29, 32
          %s245 = sadd.s32 %s241, %s244
          %s246 = smul.addr %s245, 8
          %s247 = scalar_lea.hbm %s0, %s246
          %s248 = sshll.u32 %s247, 4
          %s249 = int_to_ptr.hbm [resolvable:$true] %s248
          %s250 = sshll.u32 %s240, 4
          %s251 = int_to_ptr.vmem [resolvable:$true] %s250
          %256 = dma.hbm_to_vmem [thread:$0]  %s249, 4096, %s251, %s237, 128, 128, 8
        $region28: #{tpu_custom_call.1} parent=23 // pred_fallthru
          _
      $region24: #{tpu_custom_call.1} parent=5 // pred_fallthru
        _
      %p257 = scmp.le.s32.totalorder 1, %s22
      %p258 = scmp.lt.s32.totalorder %s22, 3
      %p259 = pnand %p257, %p258
      %p260 = pneg %p259
      // Predicated region
      $region29: #{tpu_custom_call.1} parent=5 // pred_check
        _
      $region30: #{tpu_custom_call.1} parent=5 // pred_check_branch
        %262 = sbr.rel (%p259) target = $region32
      $region31: #{tpu_custom_call.1} parent=5 // pred_region
        %s263 = ssub.s32 %s22, 1
        %s264 = sand.u32 %s49, 1
        %s265 = scalar_lea.sflag [#allocation3], %s264
        %s266 = sand.u32 %s49, 1
        %s267 = smul.addr %s266, 256
        %s268 = scalar_lea.vmem [#allocation2], %s267
        // Predicated region
        $region33: #{tpu_custom_call.1} parent=31 // pred_check
          %p269 = pneg %p62
        $region34: #{tpu_custom_call.1} parent=31 // pred_check_branch
          %271 = sbr.rel (%p269) target = $region36
        $region35: #{tpu_custom_call.1} parent=31 // pred_region
          %273 = dma.done %s265, 4096
        $region36: #{tpu_custom_call.1} parent=31 // pred_fallthru
          _
        // Predicated region
        $region37: #{tpu_custom_call.1} parent=31 // pred_check
          %p274 = pneg %p83
        $region38: #{tpu_custom_call.1} parent=31 // pred_check_branch
          %276 = sbr.rel (%p274) target = $region40
        $region39: #{tpu_custom_call.1} parent=31 // pred_region
          %278 = dma.done [#allocation6], 3072
        $region40: #{tpu_custom_call.1} parent=31 // pred_fallthru
          _
        // Predicated region
        $region41: #{tpu_custom_call.1} parent=31 // pred_check
          %p279 = pneg %p104
        $region42: #{tpu_custom_call.1} parent=31 // pred_check_branch
          %281 = sbr.rel (%p279) target = $region44
        $region43: #{tpu_custom_call.1} parent=31 // pred_region
          %283 = dma.done [#allocation6], 48
        $region44: #{tpu_custom_call.1} parent=31 // pred_fallthru
          _
        %s284 = sand.u32 %s49, 1
        %s285 = scalar_lea.sflag [#allocation3], %s284
        %s286 = sand.u32 %s49, 1
        %s287 = smul.addr %s286, 256
        %s288 = scalar_lea.vmem [#allocation2], %s287
        %p289 = pneg %p62
        %p290 = pneg %p59
        %p291 = pneg %p83
        %p292 = pneg %p80
        %p293 = pneg %p104
        %p294 = pneg %p101
        %p295 = pneg %p132
        %p296 = pneg %p129
        %s297 = sand.u32 %s119, 1
        %s298 = scalar_lea.sflag [#allocation4], %s297
        %s299 = sand.u32 %s119, 1
        %s300 = smul.addr %s299, 128
        %s301 = scalar_lea.vmem [#allocation8], %s300
        %p302 = pneg %p160
        %p303 = pneg %p157
        %s304 = sand.u32 %s27, 1
        %s305 = scalar_lea.sflag [#allocation10], %s304
        %s306 = sand.u32 %s147, 1
        %s307 = smul.addr %s306, 128
        %s308 = scalar_lea.vmem [#allocation9], %s307
        %p309 = pneg %p188
        %p310 = pneg %p185
        %s311 = sand.u32 %s27, 1
        %s312 = scalar_lea.sflag [#allocation10], %s311
        %s313 = sand.u32 %s175, 1
        %s314 = smul.addr %s313, 128
        %s315 = scalar_lea.vmem [#allocation11], %s314
        %s316 = smul.u32 32, %s32
        %s317 = smul.u32 32, %s32
        %s318 = smul.u32 32, %s32
        %s319 = smul.u32 32, %s32
        %v320 = vld [vmem:[%s268] sm:$0xff]
        %v321 = vld [vmem:[%s268 + $0x8] sm:$0xff]
        %v322 = vld [vmem:[%s268 + $0x10] sm:$0xff]
        %v323 = vld [vmem:[%s268 + $0x18] sm:$0xff]
        %v324 = vld [vmem:[%s268 + $0x20] sm:$0xff]
        %v325 = vld [vmem:[%s268 + $0x28] sm:$0xff]
        %v326 = vld [vmem:[%s268 + $0x30] sm:$0xff]
        %v327 = vld [vmem:[%s268 + $0x38] sm:$0xff]
        %v328 = vld [vmem:[%s268 + $0x40] sm:$0xff]
        %v329 = vld [vmem:[%s268 + $0x48] sm:$0xff]
        %v330 = vld [vmem:[%s268 + $0x50] sm:$0xff]
        %v331 = vld [vmem:[%s268 + $0x58] sm:$0xff]
        %v332 = vld [vmem:[%s268 + $0x60] sm:$0xff]
        %v333 = vld [vmem:[%s268 + $0x68] sm:$0xff]
        %v334 = vld [vmem:[%s268 + $0x70] sm:$0xff]
        %v335 = vld [vmem:[%s268 + $0x78] sm:$0xff]
        %v336 = vld [vmem:[%s268 + $0x80] sm:$0xff]
        %v337 = vld [vmem:[%s268 + $0x88] sm:$0xff]
        %v338 = vld [vmem:[%s268 + $0x90] sm:$0xff]
        %v339 = vld [vmem:[%s268 + $0x98] sm:$0xff]
        %v340 = vld [vmem:[%s268 + $0xa0] sm:$0xff]
        %v341 = vld [vmem:[%s268 + $0xa8] sm:$0xff]
        %v342 = vld [vmem:[%s268 + $0xb0] sm:$0xff]
        %v343 = vld [vmem:[%s268 + $0xb8] sm:$0xff]
        %v344 = vld [vmem:[%s268 + $0xc0] sm:$0xff]
        %v345 = vld [vmem:[%s268 + $0xc8] sm:$0xff]
        %v346 = vld [vmem:[%s268 + $0xd0] sm:$0xff]
        %v347 = vld [vmem:[%s268 + $0xd8] sm:$0xff]
        %v348 = vld [vmem:[%s268 + $0xe0] sm:$0xff]
        %v349 = vld [vmem:[%s268 + $0xe8] sm:$0xff]
        %v350 = vld [vmem:[%s268 + $0xf0] sm:$0xff]
        %v351 = vld [vmem:[%s268 + $0xf8] sm:$0xff]
        %v352 = vpack.c.bf16 %v321, %v320
        %v353 = vpack.c.bf16 %v323, %v322
        %v354 = vpack.c.bf16 %v325, %v324
        %v355 = vpack.c.bf16 %v327, %v326
        %v356 = vpack.c.bf16 %v329, %v328
        %v357 = vpack.c.bf16 %v331, %v330
        %v358 = vpack.c.bf16 %v333, %v332
        %v359 = vpack.c.bf16 %v335, %v334
        %v360 = vpack.c.bf16 %v337, %v336
        %v361 = vpack.c.bf16 %v339, %v338
        %v362 = vpack.c.bf16 %v341, %v340
        %v363 = vpack.c.bf16 %v343, %v342
        %v364 = vpack.c.bf16 %v345, %v344
        %v365 = vpack.c.bf16 %v347, %v346
        %v366 = vpack.c.bf16 %v349, %v348
        %v367 = vpack.c.bf16 %v351, %v350
        %v368 = vld [vmem:[#allocation5] sm:$0xff]
        %v369 = vld [vmem:[#allocation5 + $0x8] sm:$0xf]
        %v370 = vld [vmem:[#allocation5 + $0xc] sm:$0xff]
        %v371 = vld [vmem:[#allocation5 + $0x14] sm:$0xf]
        %v372 = vld [vmem:[#allocation5 + $0x18] sm:$0xff]
        %v373 = vld [vmem:[#allocation5 + $0x20] sm:$0xf]
        %v374 = vld [vmem:[#allocation5 + $0x24] sm:$0xff]
        %v375 = vld [vmem:[#allocation5 + $0x2c] sm:$0xf]
        %v376 = vld [vmem:[#allocation5 + $0x30] sm:$0xff]
        %v377 = vld [vmem:[#allocation5 + $0x38] sm:$0xf]
        %v378 = vld [vmem:[#allocation5 + $0x3c] sm:$0xff]
        %v379 = vld [vmem:[#allocation5 + $0x44] sm:$0xf]
        %v380 = vld [vmem:[#allocation5 + $0x48] sm:$0xff]
        %v381 = vld [vmem:[#allocation5 + $0x50] sm:$0xf]
        %v382 = vld [vmem:[#allocation5 + $0x54] sm:$0xff]
        %v383 = vld [vmem:[#allocation5 + $0x5c] sm:$0xf]
        %v384 = vld [vmem:[#allocation5 + $0x60] sm:$0xff]
        %v385 = vld [vmem:[#allocation5 + $0x68] sm:$0xf]
        %v386 = vld [vmem:[#allocation5 + $0x6c] sm:$0xff]
        %v387 = vld [vmem:[#allocation5 + $0x74] sm:$0xf]
        %v388 = vld [vmem:[#allocation5 + $0x78] sm:$0xff]
        %v389 = vld [vmem:[#allocation5 + $0x80] sm:$0xf]
        %v390 = vld [vmem:[#allocation5 + $0x84] sm:$0xff]
        %v391 = vld [vmem:[#allocation5 + $0x8c] sm:$0xf]
        %v392 = vld [vmem:[#allocation5 + $0x90] sm:$0xff]
        %v393 = vld [vmem:[#allocation5 + $0x98] sm:$0xf]
        %v394 = vld [vmem:[#allocation5 + $0x9c] sm:$0xff]
        %v395 = vld [vmem:[#allocation5 + $0xa4] sm:$0xf]
        %v396 = vld [vmem:[#allocation5 + $0xa8] sm:$0xff]
        %v397 = vld [vmem:[#allocation5 + $0xb0] sm:$0xf]
        %v398 = vld [vmem:[#allocation5 + $0xb4] sm:$0xff]
        %v399 = vld [vmem:[#allocation5 + $0xbc] sm:$0xf]
        %v400 = vld [vmem:[#allocation7] sm:$0x7]
        %v402 = vperm.slane %v400, 0
        %v403 = vperm.slane %v400, 1
        %v404 = vperm.slane %v400, 2
        %v440 = vunpack.c.l.b16 %v368
        %v441 = vunpack.c.h.b16 %v368
        %v442 = vunpack.c.l.b16 %v369
        %v443 = vunpack.c.l.b16 %v370
        %v444 = vunpack.c.h.b16 %v370
        %v445 = vunpack.c.l.b16 %v371
        %v446 = vunpack.c.l.b16 %v372
        %v447 = vunpack.c.h.b16 %v372
        %v448 = vunpack.c.l.b16 %v373
        %v449 = vunpack.c.l.b16 %v374
        %v450 = vunpack.c.h.b16 %v374
        %v451 = vunpack.c.l.b16 %v375
        %v452 = vunpack.c.l.b16 %v376
        %v453 = vunpack.c.h.b16 %v376
        %v454 = vunpack.c.l.b16 %v377
        %v455 = vunpack.c.l.b16 %v378
        %v456 = vunpack.c.h.b16 %v378
        %v457 = vunpack.c.l.b16 %v379
        %v458 = vunpack.c.l.b16 %v380
        %v459 = vunpack.c.h.b16 %v380
        %v460 = vunpack.c.l.b16 %v381
        %v461 = vunpack.c.l.b16 %v382
        %v462 = vunpack.c.h.b16 %v382
        %v463 = vunpack.c.l.b16 %v383
        %v464 = vunpack.c.l.b16 %v384
        %v465 = vunpack.c.h.b16 %v384
        %v466 = vunpack.c.l.b16 %v385
        %v467 = vunpack.c.l.b16 %v386
        %v468 = vunpack.c.h.b16 %v386
        %v469 = vunpack.c.l.b16 %v387
        %v470 = vunpack.c.l.b16 %v388
        %v471 = vunpack.c.h.b16 %v388
        %v472 = vunpack.c.l.b16 %v389
        %v473 = vunpack.c.l.b16 %v390
        %v474 = vunpack.c.h.b16 %v390
        %v475 = vunpack.c.l.b16 %v391
        %v476 = vunpack.c.l.b16 %v392
        %v477 = vunpack.c.h.b16 %v392
        %v478 = vunpack.c.l.b16 %v393
        %v479 = vunpack.c.l.b16 %v394
        %v480 = vunpack.c.h.b16 %v394
        %v481 = vunpack.c.l.b16 %v395
        %v482 = vunpack.c.l.b16 %v396
        %v483 = vunpack.c.h.b16 %v396
        %v484 = vunpack.c.l.b16 %v397
        %v485 = vunpack.c.l.b16 %v398
        %v486 = vunpack.c.h.b16 %v398
        %v487 = vunpack.c.l.b16 %v399
        %v488 = vpack.c.b16 %v443, %v440
        %v489 = vpack.c.b16 %v444, %v441
        %v490 = vpack.c.b16 %v445, %v442
        %v491 = vpack.c.b16 %v449, %v446
        %v492 = vpack.c.b16 %v450, %v447
        %v493 = vpack.c.b16 %v451, %v448
        %v494 = vpack.c.b16 %v455, %v452
        %v495 = vpack.c.b16 %v456, %v453
        %v496 = vpack.c.b16 %v457, %v454
        %v497 = vpack.c.b16 %v461, %v458
        %v498 = vpack.c.b16 %v462, %v459
        %v499 = vpack.c.b16 %v463, %v460
        %v500 = vpack.c.b16 %v467, %v464
        %v501 = vpack.c.b16 %v468, %v465
        %v502 = vpack.c.b16 %v469, %v466
        %v503 = vpack.c.b16 %v473, %v470
        %v504 = vpack.c.b16 %v474, %v471
        %v505 = vpack.c.b16 %v475, %v472
        %v506 = vpack.c.b16 %v479, %v476
        %v507 = vpack.c.b16 %v480, %v477
        %v508 = vpack.c.b16 %v481, %v478
        %v509 = vpack.c.b16 %v485, %v482
        %v510 = vpack.c.b16 %v486, %v483
        %v511 = vpack.c.b16 %v487, %v484
        %536 = vmatpush.bf16.msra.mxu0 %v509
        %537 = vmatpush.bf16.msra.mxu0 %v506
        %538 = vmatpush.bf16.msra.mxu0 %v503
        %539 = vmatpush.bf16.msra.mxu0 %v500
        %540 = vmatpush.bf16.msra.mxu0 %v497
        %541 = vmatpush.bf16.msra.mxu0 %v494
        %542 = vmatpush.bf16.msra.mxu0 %v491
        %543 = vmatpush.bf16.msra.mxu0 %v488
        %544 = vmatmul.bf16.gmra.mxu0 %v352
        %v545 = vpop.f32.mrf.mxu0
        %v546 = vadd.f32 %v402, %v545
        %v547 = vpop.f32.mrf.mxu0
        %v548 = vadd.f32 %v402, %v547
        %549 = vmatmul.bf16.gmra.mxu0 %v353
        %v550 = vpop.f32.mrf.mxu0
        %v551 = vadd.f32 %v402, %v550
        %v552 = vpop.f32.mrf.mxu0
        %v553 = vadd.f32 %v402, %v552
        %554 = vmatmul.bf16.gmra.mxu0 %v354
        %v555 = vpop.f32.mrf.mxu0
        %v556 = vadd.f32 %v402, %v555
        %v557 = vpop.f32.mrf.mxu0
        %v558 = vadd.f32 %v402, %v557
        %559 = vmatmul.bf16.gmra.mxu0 %v355
        %v560 = vpop.f32.mrf.mxu0
        %v561 = vadd.f32 %v402, %v560
        %v562 = vpop.f32.mrf.mxu0
        %v563 = vadd.f32 %v402, %v562
        %564 = vmatmul.bf16.gmra.mxu0 %v356
        %v565 = vpop.f32.mrf.mxu0
        %v566 = vadd.f32 %v402, %v565
        %v567 = vpop.f32.mrf.mxu0
        %v568 = vadd.f32 %v402, %v567
        %569 = vmatmul.bf16.gmra.mxu0 %v357
        %v570 = vpop.f32.mrf.mxu0
        %v571 = vadd.f32 %v402, %v570
        %v572 = vpop.f32.mrf.mxu0
        %v573 = vadd.f32 %v402, %v572
        %574 = vmatmul.bf16.gmra.mxu0 %v358
        %v575 = vpop.f32.mrf.mxu0
        %v576 = vadd.f32 %v402, %v575
        %v577 = vpop.f32.mrf.mxu0
        %v578 = vadd.f32 %v402, %v577
        %579 = vmatmul.bf16.gmra.mxu0 %v359
        %v580 = vpop.f32.mrf.mxu0
        %v581 = vadd.f32 %v402, %v580
        %v582 = vpop.f32.mrf.mxu0
        %v583 = vadd.f32 %v402, %v582
        %584 = vmatmul.bf16.gmra.mxu0 %v360
        %v585 = vpop.f32.mrf.mxu0
        %v586 = vadd.f32 %v402, %v585
        %v587 = vpop.f32.mrf.mxu0
        %v588 = vadd.f32 %v402, %v587
        %589 = vmatmul.bf16.gmra.mxu0 %v361
        %v590 = vpop.f32.mrf.mxu0
        %v591 = vadd.f32 %v402, %v590
        %v592 = vpop.f32.mrf.mxu0
        %v593 = vadd.f32 %v402, %v592
        %594 = vmatmul.bf16.gmra.mxu0 %v362
        %v595 = vpop.f32.mrf.mxu0
        %v596 = vadd.f32 %v402, %v595
        %v597 = vpop.f32.mrf.mxu0
        %v598 = vadd.f32 %v402, %v597
        %599 = vmatmul.bf16.gmra.mxu0 %v363
        %v600 = vpop.f32.mrf.mxu0
        %v601 = vadd.f32 %v402, %v600
        %v602 = vpop.f32.mrf.mxu0
        %v603 = vadd.f32 %v402, %v602
        %604 = vmatmul.bf16.gmra.mxu0 %v364
        %v605 = vpop.f32.mrf.mxu0
        %v606 = vadd.f32 %v402, %v605
        %v607 = vpop.f32.mrf.mxu0
        %v608 = vadd.f32 %v402, %v607
        %609 = vmatmul.bf16.gmra.mxu0 %v365
        %v610 = vpop.f32.mrf.mxu0
        %v611 = vadd.f32 %v402, %v610
        %v612 = vpop.f32.mrf.mxu0
        %v613 = vadd.f32 %v402, %v612
        %614 = vmatmul.bf16.gmra.mxu0 %v366
        %v615 = vpop.f32.mrf.mxu0
        %v616 = vadd.f32 %v402, %v615
        %v617 = vpop.f32.mrf.mxu0
        %v618 = vadd.f32 %v402, %v617
        %619 = vmatmul.bf16.gmra.mxu0 %v367
        %v620 = vpop.f32.mrf.mxu0
        %v621 = vadd.f32 %v402, %v620
        %v622 = vpop.f32.mrf.mxu0
        %v623 = vadd.f32 %v402, %v622
        %624 = vdwg.mxu0
        %625 = vmatpush.bf16.msra.mxu0 %v510
        %626 = vmatpush.bf16.msra.mxu0 %v507
        %627 = vmatpush.bf16.msra.mxu0 %v504
        %628 = vmatpush.bf16.msra.mxu0 %v501
        %629 = vmatpush.bf16.msra.mxu0 %v498
        %630 = vmatpush.bf16.msra.mxu0 %v495
        %631 = vmatpush.bf16.msra.mxu0 %v492
        %632 = vmatpush.bf16.msra.mxu0 %v489
        %633 = vmatmul.bf16.gmra.mxu0 %v352
        %v634 = vpop.f32.mrf.mxu0
        %v635 = vadd.f32 %v403, %v634
        %v636 = vpop.f32.mrf.mxu0
        %v637 = vadd.f32 %v403, %v636
        %638 = vmatmul.bf16.gmra.mxu0 %v353
        %v639 = vpop.f32.mrf.mxu0
        %v640 = vadd.f32 %v403, %v639
        %v641 = vpop.f32.mrf.mxu0
        %v642 = vadd.f32 %v403, %v641
        %643 = vmatmul.bf16.gmra.mxu0 %v354
        %v644 = vpop.f32.mrf.mxu0
        %v645 = vadd.f32 %v403, %v644
        %v646 = vpop.f32.mrf.mxu0
        %v647 = vadd.f32 %v403, %v646
        %648 = vmatmul.bf16.gmra.mxu0 %v355
        %v649 = vpop.f32.mrf.mxu0
        %v650 = vadd.f32 %v403, %v649
        %v651 = vpop.f32.mrf.mxu0
        %v652 = vadd.f32 %v403, %v651
        %653 = vmatmul.bf16.gmra.mxu0 %v356
        %v654 = vpop.f32.mrf.mxu0
        %v655 = vadd.f32 %v403, %v654
        %v656 = vpop.f32.mrf.mxu0
        %v657 = vadd.f32 %v403, %v656
        %658 = vmatmul.bf16.gmra.mxu0 %v357
        %v659 = vpop.f32.mrf.mxu0
        %v660 = vadd.f32 %v403, %v659
        %v661 = vpop.f32.mrf.mxu0
        %v662 = vadd.f32 %v403, %v661
        %663 = vmatmul.bf16.gmra.mxu0 %v358
        %v664 = vpop.f32.mrf.mxu0
        %v665 = vadd.f32 %v403, %v664
        %v666 = vpop.f32.mrf.mxu0
        %v667 = vadd.f32 %v403, %v666
        %668 = vmatmul.bf16.gmra.mxu0 %v359
        %v669 = vpop.f32.mrf.mxu0
        %v670 = vadd.f32 %v403, %v669
        %v671 = vpop.f32.mrf.mxu0
        %v672 = vadd.f32 %v403, %v671
        %673 = vmatmul.bf16.gmra.mxu0 %v360
        %v674 = vpop.f32.mrf.mxu0
        %v675 = vadd.f32 %v403, %v674
        %v676 = vpop.f32.mrf.mxu0
        %v677 = vadd.f32 %v403, %v676
        %678 = vmatmul.bf16.gmra.mxu0 %v361
        %v679 = vpop.f32.mrf.mxu0
        %v680 = vadd.f32 %v403, %v679
        %v681 = vpop.f32.mrf.mxu0
        %v682 = vadd.f32 %v403, %v681
        %683 = vmatmul.bf16.gmra.mxu0 %v362
        %v684 = vpop.f32.mrf.mxu0
        %v685 = vadd.f32 %v403, %v684
        %v686 = vpop.f32.mrf.mxu0
        %v687 = vadd.f32 %v403, %v686
        %688 = vmatmul.bf16.gmra.mxu0 %v363
        %v689 = vpop.f32.mrf.mxu0
        %v690 = vadd.f32 %v403, %v689
        %v691 = vpop.f32.mrf.mxu0
        %v692 = vadd.f32 %v403, %v691
        %693 = vmatmul.bf16.gmra.mxu0 %v364
        %v694 = vpop.f32.mrf.mxu0
        %v695 = vadd.f32 %v403, %v694
        %v696 = vpop.f32.mrf.mxu0
        %v697 = vadd.f32 %v403, %v696
        %698 = vmatmul.bf16.gmra.mxu0 %v365
        %v699 = vpop.f32.mrf.mxu0
        %v700 = vadd.f32 %v403, %v699
        %v701 = vpop.f32.mrf.mxu0
        %v702 = vadd.f32 %v403, %v701
        %703 = vmatmul.bf16.gmra.mxu0 %v366
        %v704 = vpop.f32.mrf.mxu0
        %v705 = vadd.f32 %v403, %v704
        %v706 = vpop.f32.mrf.mxu0
        %v707 = vadd.f32 %v403, %v706
        %708 = vmatmul.bf16.gmra.mxu0 %v367
        %v709 = vpop.f32.mrf.mxu0
        %v710 = vadd.f32 %v403, %v709
        %v711 = vpop.f32.mrf.mxu0
        %v712 = vadd.f32 %v403, %v711
        %713 = vdwg.mxu0
        %714 = vmatpush.bf16.msra.mxu0 %v511
        %715 = vmatpush.bf16.msra.mxu0 %v508
        %716 = vmatpush.bf16.msra.mxu0 %v505
        %717 = vmatpush.bf16.msra.mxu0 %v502
        %718 = vmatpush.bf16.msra.mxu0 %v499
        %719 = vmatpush.bf16.msra.mxu0 %v496
        %720 = vmatpush.bf16.msra.mxu0 %v493
        %721 = vmatpush.bf16.msra.mxu0 %v490
        %722 = vmatmul.bf16.gmra.mxu0 %v352
        %v723 = vpop.f32.mrf.mxu0
        %v724 = vadd.f32 %v404, %v723
        %v725 = vpop.f32.mrf.mxu0
        %v726 = vadd.f32 %v404, %v725
        %727 = vmatmul.bf16.gmra.mxu0 %v353
        %v728 = vpop.f32.mrf.mxu0
        %v729 = vadd.f32 %v404, %v728
        %v730 = vpop.f32.mrf.mxu0
        %v731 = vadd.f32 %v404, %v730
        %732 = vmatmul.bf16.gmra.mxu0 %v354
        %v733 = vpop.f32.mrf.mxu0
        %v734 = vadd.f32 %v404, %v733
        %v735 = vpop.f32.mrf.mxu0
        %v736 = vadd.f32 %v404, %v735
        %737 = vmatmul.bf16.gmra.mxu0 %v355
        %v738 = vpop.f32.mrf.mxu0
        %v739 = vadd.f32 %v404, %v738
        %v740 = vpop.f32.mrf.mxu0
        %v741 = vadd.f32 %v404, %v740
        %742 = vmatmul.bf16.gmra.mxu0 %v356
        %v743 = vpop.f32.mrf.mxu0
        %v744 = vadd.f32 %v404, %v743
        %v745 = vpop.f32.mrf.mxu0
        %v746 = vadd.f32 %v404, %v745
        %747 = vmatmul.bf16.gmra.mxu0 %v357
        %v748 = vpop.f32.mrf.mxu0
        %v749 = vadd.f32 %v404, %v748
        %v750 = vpop.f32.mrf.mxu0
        %v751 = vadd.f32 %v404, %v750
        %752 = vmatmul.bf16.gmra.mxu0 %v358
        %v753 = vpop.f32.mrf.mxu0
        %v754 = vadd.f32 %v404, %v753
        %v755 = vpop.f32.mrf.mxu0
        %v756 = vadd.f32 %v404, %v755
        %757 = vmatmul.bf16.gmra.mxu0 %v359
        %v758 = vpop.f32.mrf.mxu0
        %v759 = vadd.f32 %v404, %v758
        %v760 = vpop.f32.mrf.mxu0
        %v761 = vadd.f32 %v404, %v760
        %762 = vmatmul.bf16.gmra.mxu0 %v360
        %v763 = vpop.f32.mrf.mxu0
        %v764 = vadd.f32 %v404, %v763
        %v765 = vpop.f32.mrf.mxu0
        %v766 = vadd.f32 %v404, %v765
        %767 = vmatmul.bf16.gmra.mxu0 %v361
        %v768 = vpop.f32.mrf.mxu0
        %v769 = vadd.f32 %v404, %v768
        %v770 = vpop.f32.mrf.mxu0
        %v771 = vadd.f32 %v404, %v770
        %772 = vmatmul.bf16.gmra.mxu0 %v362
        %v773 = vpop.f32.mrf.mxu0
        %v774 = vadd.f32 %v404, %v773
        %v775 = vpop.f32.mrf.mxu0
        %v776 = vadd.f32 %v404, %v775
        %777 = vmatmul.bf16.gmra.mxu0 %v363
        %v778 = vpop.f32.mrf.mxu0
        %v779 = vadd.f32 %v404, %v778
        %v780 = vpop.f32.mrf.mxu0
        %v781 = vadd.f32 %v404, %v780
        %782 = vmatmul.bf16.gmra.mxu0 %v364
        %v783 = vpop.f32.mrf.mxu0
        %v784 = vadd.f32 %v404, %v783
        %v785 = vpop.f32.mrf.mxu0
        %v786 = vadd.f32 %v404, %v785
        %787 = vmatmul.bf16.gmra.mxu0 %v365
        %v788 = vpop.f32.mrf.mxu0
        %v789 = vadd.f32 %v404, %v788
        %v790 = vpop.f32.mrf.mxu0
        %v791 = vadd.f32 %v404, %v790
        %792 = vmatmul.bf16.gmra.mxu0 %v366
        %v793 = vpop.f32.mrf.mxu0
        %v794 = vadd.f32 %v404, %v793
        %v795 = vpop.f32.mrf.mxu0
        %v796 = vadd.f32 %v404, %v795
        %797 = vmatmul.bf16.gmra.mxu0 %v367
        %v798 = vpop.f32.mrf.mxu0
        %v799 = vadd.f32 %v404, %v798
        %v800 = vpop.f32.mrf.mxu0
        %v801 = vadd.f32 %v404, %v800
        %802 = vdwg.mxu0
        %v803 = vpack.c.bf16 %v635, %v546
        %v804 = vpack.c.bf16 %v724, %v724
        %v805 = vpack.c.bf16 %v637, %v548
        %v806 = vpack.c.bf16 %v726, %v726
        %v807 = vpack.c.bf16 %v640, %v551
        %v808 = vpack.c.bf16 %v729, %v729
        %v809 = vpack.c.bf16 %v642, %v553
        %v810 = vpack.c.bf16 %v731, %v731
        %v811 = vpack.c.bf16 %v645, %v556
        %v812 = vpack.c.bf16 %v734, %v734
        %v813 = vpack.c.bf16 %v647, %v558
        %v814 = vpack.c.bf16 %v736, %v736
        %v815 = vpack.c.bf16 %v650, %v561
        %v816 = vpack.c.bf16 %v739, %v739
        %v817 = vpack.c.bf16 %v652, %v563
        %v818 = vpack.c.bf16 %v741, %v741
        %v819 = vpack.c.bf16 %v655, %v566
        %v820 = vpack.c.bf16 %v744, %v744
        %v821 = vpack.c.bf16 %v657, %v568
        %v822 = vpack.c.bf16 %v746, %v746
        %v823 = vpack.c.bf16 %v660, %v571
        %v824 = vpack.c.bf16 %v749, %v749
        %v825 = vpack.c.bf16 %v662, %v573
        %v826 = vpack.c.bf16 %v751, %v751
        %v827 = vpack.c.bf16 %v665, %v576
        %v828 = vpack.c.bf16 %v754, %v754
        %v829 = vpack.c.bf16 %v667, %v578
        %v830 = vpack.c.bf16 %v756, %v756
        %v831 = vpack.c.bf16 %v670, %v581
        %v832 = vpack.c.bf16 %v759, %v759
        %v833 = vpack.c.bf16 %v672, %v583
        %v834 = vpack.c.bf16 %v761, %v761
        %v835 = vpack.c.bf16 %v675, %v586
        %v836 = vpack.c.bf16 %v764, %v764
        %v837 = vpack.c.bf16 %v677, %v588
        %v838 = vpack.c.bf16 %v766, %v766
        %v839 = vpack.c.bf16 %v680, %v591
        %v840 = vpack.c.bf16 %v769, %v769
        %v841 = vpack.c.bf16 %v682, %v593
        %v842 = vpack.c.bf16 %v771, %v771
        %v843 = vpack.c.bf16 %v685, %v596
        %v844 = vpack.c.bf16 %v774, %v774
        %v845 = vpack.c.bf16 %v687, %v598
        %v846 = vpack.c.bf16 %v776, %v776
        %v847 = vpack.c.bf16 %v690, %v601
        %v848 = vpack.c.bf16 %v779, %v779
        %v849 = vpack.c.bf16 %v692, %v603
        %v850 = vpack.c.bf16 %v781, %v781
        %v851 = vpack.c.bf16 %v695, %v606
        %v852 = vpack.c.bf16 %v784, %v784
        %v853 = vpack.c.bf16 %v697, %v608
        %v854 = vpack.c.bf16 %v786, %v786
        %v855 = vpack.c.bf16 %v700, %v611
        %v856 = vpack.c.bf16 %v789, %v789
        %v857 = vpack.c.bf16 %v702, %v613
        %v858 = vpack.c.bf16 %v791, %v791
        %v859 = vpack.c.bf16 %v705, %v616
        %v860 = vpack.c.bf16 %v794, %v794
        %v861 = vpack.c.bf16 %v707, %v618
        %v862 = vpack.c.bf16 %v796, %v796
        %v863 = vpack.c.bf16 %v710, %v621
        %v864 = vpack.c.bf16 %v799, %v799
        %v865 = vpack.c.bf16 %v712, %v623
        %v866 = vpack.c.bf16 %v801, %v801
        %867 = vst [vmem:[%s301] sm:$0xf] %v803
        %868 = vst [vmem:[%s301 + $0x4] sm:$0xf] %v805
        %869 = vst [vmem:[%s301 + $0x8] sm:$0xf] %v807
        %870 = vst [vmem:[%s301 + $0xc] sm:$0xf] %v809
        %871 = vst [vmem:[%s301 + $0x10] sm:$0xf] %v811
        %872 = vst [vmem:[%s301 + $0x14] sm:$0xf] %v813
        %873 = vst [vmem:[%s301 + $0x18] sm:$0xf] %v815
        %874 = vst [vmem:[%s301 + $0x1c] sm:$0xf] %v817
        %875 = vst [vmem:[%s301 + $0x20] sm:$0xf] %v819
        %876 = vst [vmem:[%s301 + $0x24] sm:$0xf] %v821
        %877 = vst [vmem:[%s301 + $0x28] sm:$0xf] %v823
        %878 = vst [vmem:[%s301 + $0x2c] sm:$0xf] %v825
        %879 = vst [vmem:[%s301 + $0x30] sm:$0xf] %v827
        %880 = vst [vmem:[%s301 + $0x34] sm:$0xf] %v829
        %881 = vst [vmem:[%s301 + $0x38] sm:$0xf] %v831
        %882 = vst [vmem:[%s301 + $0x3c] sm:$0xf] %v833
        %883 = vst [vmem:[%s301 + $0x40] sm:$0xf] %v835
        %884 = vst [vmem:[%s301 + $0x44] sm:$0xf] %v837
        %885 = vst [vmem:[%s301 + $0x48] sm:$0xf] %v839
        %886 = vst [vmem:[%s301 + $0x4c] sm:$0xf] %v841
        %887 = vst [vmem:[%s301 + $0x50] sm:$0xf] %v843
        %888 = vst [vmem:[%s301 + $0x54] sm:$0xf] %v845
        %889 = vst [vmem:[%s301 + $0x58] sm:$0xf] %v847
        %890 = vst [vmem:[%s301 + $0x5c] sm:$0xf] %v849
        %891 = vst [vmem:[%s301 + $0x60] sm:$0xf] %v851
        %892 = vst [vmem:[%s301 + $0x64] sm:$0xf] %v853
        %893 = vst [vmem:[%s301 + $0x68] sm:$0xf] %v855
        %894 = vst [vmem:[%s301 + $0x6c] sm:$0xf] %v857
        %895 = vst [vmem:[%s301 + $0x70] sm:$0xf] %v859
        %896 = vst [vmem:[%s301 + $0x74] sm:$0xf] %v861
        %897 = vst [vmem:[%s301 + $0x78] sm:$0xf] %v863
        %898 = vst [vmem:[%s301 + $0x7c] sm:$0xf] %v865
        %v931 = vrot.slane %v803, 4
        %v932 = vrot.slane %v805, 4
        %v933 = vrot.slane %v807, 4
        %v934 = vrot.slane %v809, 4
        %v935 = vrot.slane %v811, 4
        %v936 = vrot.slane %v813, 4
        %v937 = vrot.slane %v815, 4
        %v938 = vrot.slane %v817, 4
        %v939 = vrot.slane %v819, 4
        %v940 = vrot.slane %v821, 4
        %v941 = vrot.slane %v823, 4
        %v942 = vrot.slane %v825, 4
        %v943 = vrot.slane %v827, 4
        %v944 = vrot.slane %v829, 4
        %v945 = vrot.slane %v831, 4
        %v946 = vrot.slane %v833, 4
        %v947 = vrot.slane %v835, 4
        %v948 = vrot.slane %v837, 4
        %v949 = vrot.slane %v839, 4
        %v950 = vrot.slane %v841, 4
        %v951 = vrot.slane %v843, 4
        %v952 = vrot.slane %v845, 4
        %v953 = vrot.slane %v847, 4
        %v954 = vrot.slane %v849, 4
        %v955 = vrot.slane %v851, 4
        %v956 = vrot.slane %v853, 4
        %v957 = vrot.slane %v855, 4
        %v958 = vrot.slane %v857, 4
        %v959 = vrot.slane %v859, 4
        %v960 = vrot.slane %v861, 4
        %v961 = vrot.slane %v863, 4
        %v962 = vrot.slane %v865, 4
        %995 = vst [vmem:[%s308] sm:$0xf] %v931
        %996 = vst [vmem:[%s308 + $0x4] sm:$0xf] %v932
        %997 = vst [vmem:[%s308 + $0x8] sm:$0xf] %v933
        %998 = vst [vmem:[%s308 + $0xc] sm:$0xf] %v934
        %999 = vst [vmem:[%s308 + $0x10] sm:$0xf] %v935
        %1000 = vst [vmem:[%s308 + $0x14] sm:$0xf] %v936
        %1001 = vst [vmem:[%s308 + $0x18] sm:$0xf] %v937
        %1002 = vst [vmem:[%s308 + $0x1c] sm:$0xf] %v938
        %1003 = vst [vmem:[%s308 + $0x20] sm:$0xf] %v939
        %1004 = vst [vmem:[%s308 + $0x24] sm:$0xf] %v940
        %1005 = vst [vmem:[%s308 + $0x28] sm:$0xf] %v941
        %1006 = vst [vmem:[%s308 + $0x2c] sm:$0xf] %v942
        %1007 = vst [vmem:[%s308 + $0x30] sm:$0xf] %v943
        %1008 = vst [vmem:[%s308 + $0x34] sm:$0xf] %v944
        %1009 = vst [vmem:[%s308 + $0x38] sm:$0xf] %v945
        %1010 = vst [vmem:[%s308 + $0x3c] sm:$0xf] %v946
        %1011 = vst [vmem:[%s308 + $0x40] sm:$0xf] %v947
        %1012 = vst [vmem:[%s308 + $0x44] sm:$0xf] %v948
        %1013 = vst [vmem:[%s308 + $0x48] sm:$0xf] %v949
        %1014 = vst [vmem:[%s308 + $0x4c] sm:$0xf] %v950
        %1015 = vst [vmem:[%s308 + $0x50] sm:$0xf] %v951
        %1016 = vst [vmem:[%s308 + $0x54] sm:$0xf] %v952
        %1017 = vst [vmem:[%s308 + $0x58] sm:$0xf] %v953
        %1018 = vst [vmem:[%s308 + $0x5c] sm:$0xf] %v954
        %1019 = vst [vmem:[%s308 + $0x60] sm:$0xf] %v955
        %1020 = vst [vmem:[%s308 + $0x64] sm:$0xf] %v956
        %1021 = vst [vmem:[%s308 + $0x68] sm:$0xf] %v957
        %1022 = vst [vmem:[%s308 + $0x6c] sm:$0xf] %v958
        %1023 = vst [vmem:[%s308 + $0x70] sm:$0xf] %v959
        %1024 = vst [vmem:[%s308 + $0x74] sm:$0xf] %v960
        %1025 = vst [vmem:[%s308 + $0x78] sm:$0xf] %v961
        %1026 = vst [vmem:[%s308 + $0x7c] sm:$0xf] %v962
        %1027 = vst [vmem:[%s315] sm:$0xf] %v804
        %1028 = vst [vmem:[%s315 + $0x4] sm:$0xf] %v806
        %1029 = vst [vmem:[%s315 + $0x8] sm:$0xf] %v808
        %1030 = vst [vmem:[%s315 + $0xc] sm:$0xf] %v810
        %1031 = vst [vmem:[%s315 + $0x10] sm:$0xf] %v812
        %1032 = vst [vmem:[%s315 + $0x14] sm:$0xf] %v814
        %1033 = vst [vmem:[%s315 + $0x18] sm:$0xf] %v816
        %1034 = vst [vmem:[%s315 + $0x1c] sm:$0xf] %v818
        %1035 = vst [vmem:[%s315 + $0x20] sm:$0xf] %v820
        %1036 = vst [vmem:[%s315 + $0x24] sm:$0xf] %v822
        %1037 = vst [vmem:[%s315 + $0x28] sm:$0xf] %v824
        %1038 = vst [vmem:[%s315 + $0x2c] sm:$0xf] %v826
        %1039 = vst [vmem:[%s315 + $0x30] sm:$0xf] %v828
        %1040 = vst [vmem:[%s315 + $0x34] sm:$0xf] %v830
        %1041 = vst [vmem:[%s315 + $0x38] sm:$0xf] %v832
        %1042 = vst [vmem:[%s315 + $0x3c] sm:$0xf] %v834
        %1043 = vst [vmem:[%s315 + $0x40] sm:$0xf] %v836
        %1044 = vst [vmem:[%s315 + $0x44] sm:$0xf] %v838
        %1045 = vst [vmem:[%s315 + $0x48] sm:$0xf] %v840
        %1046 = vst [vmem:[%s315 + $0x4c] sm:$0xf] %v842
        %1047 = vst [vmem:[%s315 + $0x50] sm:$0xf] %v844
        %1048 = vst [vmem:[%s315 + $0x54] sm:$0xf] %v846
        %1049 = vst [vmem:[%s315 + $0x58] sm:$0xf] %v848
        %1050 = vst [vmem:[%s315 + $0x5c] sm:$0xf] %v850
        %1051 = vst [vmem:[%s315 + $0x60] sm:$0xf] %v852
        %1052 = vst [vmem:[%s315 + $0x64] sm:$0xf] %v854
        %1053 = vst [vmem:[%s315 + $0x68] sm:$0xf] %v856
        %1054 = vst [vmem:[%s315 + $0x6c] sm:$0xf] %v858
        %1055 = vst [vmem:[%s315 + $0x70] sm:$0xf] %v860
        %1056 = vst [vmem:[%s315 + $0x74] sm:$0xf] %v862
        %1057 = vst [vmem:[%s315 + $0x78] sm:$0xf] %v864
        %1058 = vst [vmem:[%s315 + $0x7c] sm:$0xf] %v866
        %s1059 = sand.u32 %s119, 1
        %s1060 = scalar_lea.sflag [#allocation4], %s1059
        %s1061 = sand.u32 %s119, 1
        %s1062 = smul.addr %s1061, 128
        %s1063 = scalar_lea.vmem [#allocation8], %s1062
        %s1064 = sand.u32 %s27, 1
        %s1065 = scalar_lea.sflag [#allocation10], %s1064
        %s1066 = sand.u32 %s147, 1
        %s1067 = smul.addr %s1066, 128
        %s1068 = scalar_lea.vmem [#allocation9], %s1067
        %s1069 = sand.u32 %s27, 1
        %s1070 = scalar_lea.sflag [#allocation10], %s1069
        %s1071 = sand.u32 %s175, 1
        %s1072 = smul.addr %s1071, 128
        %s1073 = scalar_lea.vmem [#allocation11], %s1072
        // Predicated region
        $region45: #{tpu_custom_call.1} parent=31 // pred_check
          %p1074 = pneg %p129
        $region46: #{tpu_custom_call.1} parent=31 // pred_check_branch
          %1076 = sbr.rel (%p1074) target = $region48
        $region47: #{tpu_custom_call.1} parent=31 // pred_region
          %s1077 = smul.u32 32, %s32
          %1079 = vsyncadd %s1060, 0
          %s1080 = smul.addr %s31, 32
          %s1081 = sadd.s32 %s1077, %s1080
          %s1082 = smul.addr %s1081, 4
          %s1083 = scalar_lea.hbm %s3, %s1082
          %s1084 = sshll.u32 %s1063, 4
          %s1085 = int_to_ptr.vmem [resolvable:$true] %s1084
          %s1086 = sshll.u32 %s1083, 4
          %s1087 = int_to_ptr.hbm [resolvable:$true] %s1086
          %1092 = dma.vmem_to_hbm [thread:$0]  %s1085, 2048, %s1087, %s1060, 64, 64, 4
        $region48: #{tpu_custom_call.1} parent=31 // pred_fallthru
          _
        // Predicated region
        $region49: #{tpu_custom_call.1} parent=31 // pred_check
          %p1093 = pneg %p157
        $region50: #{tpu_custom_call.1} parent=31 // pred_check_branch
          %1095 = sbr.rel (%p1093) target = $region52
        $region51: #{tpu_custom_call.1} parent=31 // pred_region
          %s1096 = smul.u32 32, %s32
          %1098 = vsyncadd %s1065, 0
          %s1099 = smul.addr %s31, 32
          %s1100 = sadd.s32 %s1096, %s1099
          %s1101 = smul.addr %s1100, 4
          %s1102 = scalar_lea.hbm %s4, %s1101
          %s1103 = sshll.u32 %s1068, 4
          %s1104 = int_to_ptr.vmem [resolvable:$true] %s1103
          %s1105 = sshll.u32 %s1102, 4
          %s1106 = int_to_ptr.hbm [resolvable:$true] %s1105
          %1111 = dma.vmem_to_hbm [thread:$0]  %s1104, 2048, %s1106, %s1065, 64, 64, 4
        $region52: #{tpu_custom_call.1} parent=31 // pred_fallthru
          _
        // Predicated region
        $region53: #{tpu_custom_call.1} parent=31 // pred_check
          %p1112 = pneg %p185
        $region54: #{tpu_custom_call.1} parent=31 // pred_check_branch
          %1114 = sbr.rel (%p1112) target = $region56
        $region55: #{tpu_custom_call.1} parent=31 // pred_region
          %s1115 = smul.u32 32, %s32
          %1117 = vsyncadd %s1070, 0
          %s1118 = smul.addr %s31, 32
          %s1119 = sadd.s32 %s1115, %s1118
          %s1120 = smul.addr %s1119, 4
          %s1121 = scalar_lea.hbm %s5, %s1120
          %s1122 = sshll.u32 %s1073, 4
          %s1123 = int_to_ptr.vmem [resolvable:$true] %s1122
          %s1124 = sshll.u32 %s1121, 4
          %s1125 = int_to_ptr.hbm [resolvable:$true] %s1124
          %1130 = dma.vmem_to_hbm [thread:$0]  %s1123, 2048, %s1125, %s1070, 64, 64, 4
        $region56: #{tpu_custom_call.1} parent=31 // pred_fallthru
          _
      $region32: #{tpu_custom_call.1} parent=5 // pred_fallthru
        _
      %p1131 = scmp.le.s32.totalorder 2, %s22
      // Predicated region
      $region57: #{tpu_custom_call.1} parent=5 // pred_check
        %p1132 = pneg %p1131
      $region58: #{tpu_custom_call.1} parent=5 // pred_check_branch
        %1134 = sbr.rel (%p1132) target = $region60
      $region59: #{tpu_custom_call.1} parent=5 // pred_region
        %s1135 = ssub.s32 %s22, 2
        // Predicated region
        $region61: #{tpu_custom_call.1} parent=59 // pred_check
          %p1136 = pneg %p135
        $region62: #{tpu_custom_call.1} parent=59 // pred_check_branch
          %1138 = sbr.rel (%p1136) target = $region64
        $region63: #{tpu_custom_call.1} parent=59 // pred_region
          %s1139 = sand.u32 %s120, 1
          %s1140 = scalar_lea.sflag [#allocation4], %s1139
          %s1141 = sand.u32 %s120, 1
          %s1142 = smul.addr %s1141, 128
          %s1143 = scalar_lea.vmem [#allocation8], %s1142
          %1145 = dma.done %s1140, 2048
        $region64: #{tpu_custom_call.1} parent=59 // pred_fallthru
          _
        // Predicated region
        $region65: #{tpu_custom_call.1} parent=59 // pred_check
          %p1146 = pneg %p163
        $region66: #{tpu_custom_call.1} parent=59 // pred_check_branch
          %1148 = sbr.rel (%p1146) target = $region68
        $region67: #{tpu_custom_call.1} parent=59 // pred_region
          %s1149 = sand.u32 %s28, 1
          %s1150 = scalar_lea.sflag [#allocation10], %s1149
          %s1151 = sand.u32 %s148, 1
          %s1152 = smul.addr %s1151, 128
          %s1153 = scalar_lea.vmem [#allocation9], %s1152
          %1155 = dma.done %s1150, 2048
        $region68: #{tpu_custom_call.1} parent=59 // pred_fallthru
          _
        // Predicated region
        $region69: #{tpu_custom_call.1} parent=59 // pred_check
          %p1156 = pneg %p191
        $region70: #{tpu_custom_call.1} parent=59 // pred_check_branch
          %1158 = sbr.rel (%p1156) target = $region72
        $region71: #{tpu_custom_call.1} parent=59 // pred_region
          %s1159 = sand.u32 %s28, 1
          %s1160 = scalar_lea.sflag [#allocation10], %s1159
          %s1161 = sand.u32 %s176, 1
          %s1162 = smul.addr %s1161, 128
          %s1163 = scalar_lea.vmem [#allocation11], %s1162
          %1165 = dma.done %s1160, 2048
        $region72: #{tpu_custom_call.1} parent=59 // pred_fallthru
          _
      $region60: #{tpu_custom_call.1} parent=5 // pred_fallthru
        _
    $region6: #{tpu_custom_call.1} parent=1 // loop_footer
      %s26 = sadd.s32 1, %s22
    $region7: #{tpu_custom_call.1} parent=1 // loop_footer_branch
      %21 = sbr.rel target = $region3
    $region8: #{tpu_custom_call.1} parent=1 // loop_exit
      _
    %1166 = vsyncpa [#allocation3], 1
    %s1167 = scalar_lea.sflag [#allocation3], 1
    %1168 = vsyncpa %s1167, 1
    %1169 = vsyncpa [#allocation6], 1
    %1170 = vsyncpa [#allocation4], 1
    %s1171 = scalar_lea.sflag [#allocation4], 1
    %1172 = vsyncpa %s1171, 1
    %1173 = vsyncpa [#allocation10], 1
    %s1174 = scalar_lea.sflag [#allocation10], 1
    %1175 = vsyncpa %s1174, 1

</llo_original>
